<compile_context>
chip_gen: v5e
topology: v5e:2x2
jax: 0.10.0
libtpu: 0.0.40
codegen_flags: <defaults>
</compile_context>

<pallas_src>
import functools

import jax
import jax.numpy as jnp
from jax import lax
from jax.experimental import pallas as pl
from jax.experimental.pallas import tpu as pltpu

LANES = 128
SUBLANES = 8


def _device_kind():
    try:
        return jax.devices()[0].device_kind.lower()
    except Exception:
        return ""


def _chip_config():
    kind = _device_kind()
    if "v7" in kind or "tpu7" in kind:
        # 64 MiB VMEM, 3.2 TB/s HBM, 2 TensorCores: big tiles + real core split.
        return dict(num_cores=2, tile_bytes=6 << 20, vmem_limit=48 << 20,
                    core_parallel=True)
    if "v6" in kind or "tpu6" in kind:
        return dict(num_cores=1, tile_bytes=4 << 20, vmem_limit=48 << 20,
                    core_parallel=False)
    # v5e / unknown: 2 MiB/input tiles fit the 16 MiB default scoped VMEM.
    return dict(num_cores=1, tile_bytes=2 << 20, vmem_limit=None,
                core_parallel=False)


def _winrate_kernel(x_ref, y_ref, o_ref, *, rows, block_rows, total_row_blocks,
                    steps_per_core, num_cores):
    if num_cores > 1:
        c = pl.program_id(0)          # core shard (core-parallel)
        j = pl.program_id(1)          # reduction step within the shard
        blk = c * steps_per_core + j  # logical row-block index (may overshoot)
    else:
        j = pl.program_id(0)
        blk = j

    @pl.when(j == 0)
    def _():
        o_ref[...] = jnp.zeros_like(o_ref)

    lt = x_ref[...] < y_ref[...]      # native-dtype compare on the VPU

    def fold(mat_bool):
        # (block_rows, 128) bool -> (8, 128) int32 partials; axis-0 sum is
        # cross-vreg VPU adds only (no per-step XLU cross-lane reduce).
        return jnp.sum(
            mat_bool.astype(jnp.int32).reshape(
                block_rows // SUBLANES, SUBLANES, LANES),
            axis=0)

    # Steady state: every row of this tile is a real, fully valid row.
    @pl.when(blk < total_row_blocks - 1)
    def _():
        o_ref[...] += fold(lt)

    # Last logical block (may be row-partial) and clamped-duplicate blocks
    # from the multi-core split: mask by row index only (the aligned prefix
    # guarantees every valid row is lane-complete).
    @pl.when(blk >= total_row_blocks - 1)
    def _():
        valid_rows = rows - blk * block_rows          # scalar; <= 0 for duplicates
        row_idx = lax.broadcasted_iota(jnp.int32, (block_rows, 1), 0)
        o_ref[...] += fold(jnp.logical_and(lt, row_idx < valid_rows))


@functools.partial(jax.jit, static_argnames=("small_input_threshold",))
def winning_rate_reversed(x, y, *, small_input_threshold=1 << 15):
    """Pallas TPU equivalent of WinningRateReversed.forward(x, y)."""
    xf = jnp.ravel(x)
    yf = jnp.ravel(y)
    assert xf.shape[0] == yf.shape[0], "x and y must have the same numel"
    n = int(xf.shape[0])
    assert n > 0

    if xf.dtype != yf.dtype:
        common = jnp.result_type(xf.dtype, yf.dtype)
        xf = xf.astype(common)
        yf = yf.astype(common)

    cfg = _chip_config()
    itemsize = jnp.dtype(xf.dtype).itemsize
    # dtype-native packed sublane multiple: 8 (f32), 16 (bf16), 32 (int8/fp8)
    sub_mult = SUBLANES * max(1, 4 // itemsize)
    align_unit = sub_mult * LANES

    n_aligned = (n // align_unit) * align_unit

    # Small-input fast path: a fused XLA compare+reduce beats kernel launch
    # + grid overhead, and also covers "nothing aligned to run the kernel on".
    if n_aligned == 0 or n < small_input_threshold:
        lt_count = jnp.sum((xf < yf).astype(jnp.int32))
        return jnp.float32(1.0) - lt_count.astype(jnp.float32) / jnp.float32(n)

    rows = n_aligned // LANES
    x2 = xf[:n_aligned].reshape(rows, LANES)   # aligned prefix: copy-free reshape
    y2 = yf[:n_aligned].reshape(rows, LANES)

    target_rows = (cfg["tile_bytes"] // (LANES * itemsize)) // sub_mult * sub_mult
    block_rows = max(sub_mult, min(target_rows, rows))

    total_row_blocks = pl.cdiv(rows, block_rows)
    num_cores = min(cfg["num_cores"], total_row_blocks)

    if num_cores > 1:
        steps_per_core = pl.cdiv(total_row_blocks, num_cores)
        grid = (num_cores, steps_per_core)

        def in_map(c, j):
            # Clamp so DMAs stay in-bounds; duplicated blocks contribute 0 via
            # the in-kernel row mask (valid_rows <= 0 there).
            return (jnp.minimum(c * steps_per_core + j, total_row_blocks - 1), 0)

        out_map = lambda c, j: (c, 0)
        dims = (pltpu.CORE_PARALLEL if cfg["core_parallel"] else "parallel",
                "arbitrary")
        out_rows = num_cores * SUBLANES
    else:
        steps_per_core = total_row_blocks
        grid = (total_row_blocks,)
        in_map = lambda j: (j, 0)
        out_map = lambda j: (0, 0)
        dims = ("arbitrary",)
        out_rows = SUBLANES

    kernel = functools.partial(
        _winrate_kernel,
        rows=rows,
        block_rows=block_rows,
        total_row_blocks=total_row_blocks,
        steps_per_core=steps_per_core,
        num_cores=num_cores,
    )

    cp_kwargs = dict(dimension_semantics=dims)
    if cfg["vmem_limit"] is not None:
        cp_kwargs["vmem_limit_bytes"] = cfg["vmem_limit"]

    counts = pl.pallas_call(
        kernel,
        out_shape=jax.ShapeDtypeStruct((out_rows, LANES), jnp.int32),
        grid_spec=pltpu.PrefetchScalarGridSpec(
            num_scalar_prefetch=0,
            grid=grid,
            in_specs=[
                pl.BlockSpec((block_rows, LANES), in_map),
                pl.BlockSpec((block_rows, LANES), in_map),
            ],
            # Per-core accumulator slab: constant across the reduction axis.
            out_specs=pl.BlockSpec((SUBLANES, LANES), out_map),
        ),
        compiler_params=pltpu.CompilerParams(**cp_kwargs),
    )(x2, y2)

    total = jnp.sum(counts)  # exact int32 count of (x < y) on the aligned prefix
    if n_aligned < n:
        # Ragged tail (< align_unit elements): one-line jnp fold, no full-array pad.
        total = total + jnp.sum((xf[n_aligned:] < yf[n_aligned:]).astype(jnp.int32))

    return jnp.float32(1.0) - total.astype(jnp.float32) / jnp.float32(n)


if __name__ == "__main__":
    key = jax.random.PRNGKey(0)
    kx, ky = jax.random.split(key)

    def ref_loss(a, b):
        return 1.0 - jnp.mean((jnp.ravel(a) < jnp.ravel(b)).astype(jnp.float32))

    # 1) Small shape typical of the loss usage; force the Pallas path.
    x = jax.random.normal(kx, (2, 4, 16, 16), dtype=jnp.float32)
    y = jax.random.normal(ky, (2, 4, 16, 16), dtype=jnp.float32)
    out = winning_rate_reversed(x, y, small_input_threshold=0)
    jax.block_until_ready(out)
    assert abs(float(out) - float(ref_loss(x, y))) < 1e-6, (float(out), float(ref_loss(x, y)))

    # 2) Medium shape through the default (kernel) path.
    xm = jax.random.normal(kx, (64, 1024), dtype=jnp.float32)
    ym = jax.random.normal(ky, (64, 1024), dtype=jnp.float32)
    outm = winning_rate_reversed(xm, ym)
    jax.block_until_ready(outm)
    assert abs(float(outm) - float(ref_loss(xm, ym))) < 1e-6

    # 3) Ragged size: kernel on the aligned prefix + jnp tail fold.
    xr = jax.random.normal(kx, (2148,), dtype=jnp.float32)
    yr = jax.random.normal(ky, (2148,), dtype=jnp.float32)
    outr = winning_rate_reversed(xr, yr, small_input_threshold=0)
    jax.block_until_ready(outr)
    assert abs(float(outr) - float(ref_loss(xr, yr))) < 1e-6

    # 4) Tiny ragged input: pure-jnp fast path.
    xs = jax.random.normal(kx, (3, 5, 7), dtype=jnp.float32)
    ys = jax.random.normal(ky, (3, 5, 7), dtype=jnp.float32)
    outs = winning_rate_reversed(xs, ys)
    jax.block_until_ready(outs)
    assert abs(float(outs) - float(ref_loss(xs, ys))) < 1e-6

    # 5) bf16: exercises the packed-dtype (16-row sublane multiple) path.
    xb = jax.random.normal(kx, (32, 128), dtype=jnp.bfloat16)
    yb = jax.random.normal(ky, (32, 128), dtype=jnp.bfloat16)
    outb = winning_rate_reversed(xb, yb, small_input_threshold=0)
    jax.block_until_ready(outb)
    assert abs(float(outb) - float(ref_loss(xb, yb))) < 1e-6

    print("KERNEL_OK")
</pallas_src>

<mosaic_0001>
module attributes {stable_mosaic.version = 11 : i64} {
  func.func @_winrate_kernel(%arg0: i32, %arg1: memref<16x128xf32, #tpu.memory_space<vmem>>, %arg2: memref<16x128xf32, #tpu.memory_space<vmem>>, %arg3: memref<8x128xi32, #tpu.memory_space<vmem>>) attributes {dimension_semantics = [#tpu.dimension_semantics<arbitrary>], iteration_bounds = array<i64: 1>, scalar_prefetch = 0 : i64, scratch_operands = 0 : i64, tpu.core_type = #tpu.core_type<tc>, window_params = [{transform_indices = @transform_0, window_bounds = array<i64: 16, 128>}, {transform_indices = @transform_1, window_bounds = array<i64: 16, 128>}, {pipeline_mode = #tpu.pipeline_mode<synchronous>, transform_indices = @transform_2, window_bounds = array<i64: 8, 128>}]} {
    %c0_i32 = arith.constant 0 : i32
    %0 = arith.cmpi eq, %arg0, %c0_i32 : i32
    %1 = arith.extui %0 : i1 to i32
    %c0_i32_0 = arith.constant 0 : i32
    %2 = arith.cmpi ne, %1, %c0_i32_0 : i32
    scf.if %2 {
      %c0_i32_8 = arith.constant 0 : i32
      %12 = vector.broadcast %c0_i32_8 : i32 to vector<8x128xi32>
      %c0_9 = arith.constant 0 : index
      %c0_10 = arith.constant 0 : index
      %13 = vector.load %arg3[%c0_9, %c0_10] : memref<8x128xi32, #tpu.memory_space<vmem>>, vector<8x128xi32>
      tpu.vector_store %arg3[%c0_9, %c0_10], %12 {strides = array<i32>} : memref<8x128xi32, #tpu.memory_space<vmem>>, vector<8x128xi32>,
    } else {
    }
    %c0 = arith.constant 0 : index
    %c0_1 = arith.constant 0 : index
    %3 = vector.load %arg1[%c0, %c0_1] : memref<16x128xf32, #tpu.memory_space<vmem>>, vector<16x128xf32>
    %c0_2 = arith.constant 0 : index
    %c0_3 = arith.constant 0 : index
    %4 = vector.load %arg2[%c0_2, %c0_3] : memref<16x128xf32, #tpu.memory_space<vmem>>, vector<16x128xf32>
    %5 = arith.cmpf olt, %3, %4 : vector<16x128xf32>
    %c0_i32_4 = arith.constant 0 : i32
    %6 = arith.cmpi slt, %arg0, %c0_i32_4 : i32
    %7 = arith.extui %6 : i1 to i32
    %c0_i32_5 = arith.constant 0 : i32
    %8 = arith.cmpi ne, %7, %c0_i32_5 : i32
    scf.if %8 {
      %c0_8 = arith.constant 0 : index
      %c0_9 = arith.constant 0 : index
      %12 = vector.load %arg3[%c0_8, %c0_9] : memref<8x128xi32, #tpu.memory_space<vmem>>, vector<8x128xi32>
      %13 = arith.extui %5 : vector<16x128xi1> to vector<16x128xi32>
      %14 = vector.shape_cast %13 : vector<16x128xi32> to vector<2x8x128xi32>
      %cst = arith.constant dense<0> : vector<8x128xi32>
      %15 = vector.multi_reduction <add>, %14, %cst [0] : vector<2x8x128xi32> to vector<8x128xi32>
      %16 = arith.addi %12, %15 : vector<8x128xi32>
      %c0_10 = arith.constant 0 : index
      %c0_11 = arith.constant 0 : index
      %17 = vector.load %arg3[%c0_10, %c0_11] : memref<8x128xi32, #tpu.memory_space<vmem>>, vector<8x128xi32>
      tpu.vector_store %arg3[%c0_10, %c0_11], %16 {strides = array<i32>} : memref<8x128xi32, #tpu.memory_space<vmem>>, vector<8x128xi32>,
    } else {
    }
    %c0_i32_6 = arith.constant 0 : i32
    %9 = arith.cmpi sge, %arg0, %c0_i32_6 : i32
    %10 = arith.extui %9 : i1 to i32
    %c0_i32_7 = arith.constant 0 : i32
    %11 = arith.cmpi ne, %10, %c0_i32_7 : i32
    scf.if %11 {
      %c16_i32 = arith.constant 16 : i32
      %12 = arith.muli %arg0, %c16_i32 : i32
      %c16_i32_8 = arith.constant 16 : i32
      %13 = arith.subi %c16_i32_8, %12 : i32
      %14 = tpu.iota {dimensions = array<i32: 0>} : vector<16x1xi32>
      %c0_9 = arith.constant 0 : index
      %c0_10 = arith.constant 0 : index
      %15 = vector.load %arg3[%c0_9, %c0_10] : memref<8x128xi32, #tpu.memory_space<vmem>>, vector<8x128xi32>
      %16 = vector.broadcast %13 : i32 to vector<16x1xi32>
      %17 = arith.cmpi slt, %14, %16 : vector<16x1xi32>
      %18 = vector.broadcast %17 : vector<16x1xi1> to vector<16x128xi1>
      %19 = arith.andi %5, %18 : vector<16x128xi1>
      %20 = arith.extui %19 : vector<16x128xi1> to vector<16x128xi32>
      %21 = vector.shape_cast %20 : vector<16x128xi32> to vector<2x8x128xi32>
      %cst = arith.constant dense<0> : vector<8x128xi32>
      %22 = vector.multi_reduction <add>, %21, %cst [0] : vector<2x8x128xi32> to vector<8x128xi32>
      %23 = arith.addi %15, %22 : vector<8x128xi32>
      %c0_11 = arith.constant 0 : index
      %c0_12 = arith.constant 0 : index
      %24 = vector.load %arg3[%c0_11, %c0_12] : memref<8x128xi32, #tpu.memory_space<vmem>>, vector<8x128xi32>
      tpu.vector_store %arg3[%c0_11, %c0_12], %23 {strides = array<i32>} : memref<8x128xi32, #tpu.memory_space<vmem>>, vector<8x128xi32>,
    } else {
    }
    return
  }
  func.func @transform_0(%arg0: i32) -> (i32, i32) {
    %c0_i32 = arith.constant 0 : i32
    %c0_i32_0 = arith.constant 0 : i32
    return %arg0, %c0_i32 : i32, i32
  }
  func.func @transform_1(%arg0: i32) -> (i32, i32) {
    %c0_i32 = arith.constant 0 : i32
    %c0_i32_0 = arith.constant 0 : i32
    return %arg0, %c0_i32 : i32, i32
  }
  func.func @transform_2(%arg0: i32) -> (i32, i32) {
    %c0_i32 = arith.constant 0 : i32
    %c0_i32_0 = arith.constant 0 : i32
    %c0_i32_1 = arith.constant 0 : i32
    return %c0_i32, %c0_i32_0 : i32, i32
  }
}

</mosaic_0001>

<llo_original>
// kernel: winning_rate_reversed.1
$region0: #{winning_rate_reversed.1}
  #allocation0 [shape = 'u32[]', space=smem, size = 0x4, offset = 0x4, fixed_abs, tag = 'smem constant byte address 0x4 - core index']
  #allocation1 [shape = 'u32[72,128]{1,0:T(1,128)}', space=vmem, size = 0x9000, scoped, tag = 'internal scratch']
  %s0 = inlined_call_operand.vmem [shape: f32[16,128], index: 0, kind: input, shape index: {}]
  %s1 = inlined_call_operand.vmem [shape: f32[16,128], index: 1, kind: input, shape index: {}]
  %s2 = inlined_call_operand.vmem [shape: s32[8,128], index: 2, kind: output, shape index: {}]
  %s3 = sld [smem:[#allocation0]]
  $region30: #{winning_rate_reversed.1} parent=0
    _
  %s5 = ssub.s32 1, %s3
  %s6 = scalar_select 0, %s5, %s3
  // Predicated region
  $region2: #{winning_rate_reversed.1} parent=0 // pred_check
    _
  $region3: #{winning_rate_reversed.1} parent=0 // pred_check_branch
    %8 = sbr.rel (0) target = $region5
  $region4: #{winning_rate_reversed.1} parent=0 // pred_region
    _
  $region5: #{winning_rate_reversed.1} parent=0 // pred_fallthru
    _
  // Predicated region
  $region6: #{winning_rate_reversed.1} parent=0 // pred_check
    _
  $region7: #{winning_rate_reversed.1} parent=0 // pred_check_branch
    %10 = sbr.rel (0) target = $region9
  $region8: #{winning_rate_reversed.1} parent=0 // pred_region
    _
  $region9: #{winning_rate_reversed.1} parent=0 // pred_fallthru
    _
  %p11 = scmp.eq.s32.totalorder 0, 0
  // Predicated region
  $region10: #{winning_rate_reversed.1} parent=0 // pred_check
    %p12 = pneg %p11
  $region11: #{winning_rate_reversed.1} parent=0 // pred_check_branch
    %14 = sbr.rel (%p12) target = $region13
  $region12: #{winning_rate_reversed.1} parent=0 // pred_region
    %15 = vst [vmem:[%s2] sm:$0xff] 0
  $region13: #{winning_rate_reversed.1} parent=0 // pred_fallthru
    _
  %v16 = vld [vmem:[%s0] sm:$0xff]
  %v17 = vld [vmem:[%s0 + $0x8] sm:$0xff]
  %v18 = vld [vmem:[%s1] sm:$0xff]
  %v19 = vld [vmem:[%s1 + $0x8] sm:$0xff]
  %vm20 = vcmp.lt.f32.partialorder %v16, %v18
  %vm21 = vcmp.lt.f32.partialorder %v17, %v19
  %p22 = scmp.lt.s32.totalorder 0, 0
  // Predicated region
  $region14: #{winning_rate_reversed.1} parent=0 // pred_check
    %p23 = pneg %p22
  $region15: #{winning_rate_reversed.1} parent=0 // pred_check_branch
    %25 = sbr.rel (%p23) target = $region17
  $region16: #{winning_rate_reversed.1} parent=0 // pred_region
    %v26 = vld [vmem:[%s2] sm:$0xff]
    %v27 = vsel %vm20, 1, 0
    %v28 = vsel %vm21, 1, 0
    %v29 = vadd.s32 %v27, %v28
    %v30 = vadd.s32 %v26, %v29
    %31 = vst [vmem:[%s2] sm:$0xff] %v30
  $region17: #{winning_rate_reversed.1} parent=0 // pred_fallthru
    _
  %p32 = scmp.ge.s32.totalorder 0, 0
  // Predicated region
  $region18: #{winning_rate_reversed.1} parent=0 // pred_check
    %p33 = pneg %p32
  $region19: #{winning_rate_reversed.1} parent=0 // pred_check_branch
    %35 = sbr.rel (%p33) target = $region21
  $region20: #{winning_rate_reversed.1} parent=0 // pred_region
    %s36 = smul.u32 0, 16
    %s37 = ssub.s32 16, %s36
    %v38 = vlaneseq
    %v39 = vshrl.u32 %v38, 7
    %v40 = vadd.s32 %v39, 8
    %v41 = vld [vmem:[%s2] sm:$0xff]
    %v42 = vstv %s37
    %vm43 = vcmp.lt.s32.totalorder %v39, %v42
    %vm44 = vcmp.lt.s32.totalorder %v40, %v42
    %v45 = vsel %vm43, 1, 0
    %v46 = vsel %vm44, 1, 0
    %vm47 = vcmp.eq.s32.totalorder %v45, 1
    %vm48 = vcmp.eq.s32.totalorder %v46, 1
    %vm49 = vmand %vm20, %vm47
    %vm50 = vmand %vm21, %vm48
    %v51 = vsel %vm49, 1, 0
    %v52 = vsel %vm50, 1, 0
    %v53 = vadd.s32 %v51, %v52
    %v54 = vadd.s32 %v41, %v53
    %55 = vst [vmem:[%s2] sm:$0xff] %v54
  $region21: #{winning_rate_reversed.1} parent=0 // pred_fallthru
    _
  // Predicated region
  $region22: #{winning_rate_reversed.1} parent=0 // pred_check
    _
  $region23: #{winning_rate_reversed.1} parent=0 // pred_check_branch
    %57 = sbr.rel (0) target = $region25
  $region24: #{winning_rate_reversed.1} parent=0 // pred_region
    _
  $region25: #{winning_rate_reversed.1} parent=0 // pred_fallthru
    _
  // Predicated region
  $region26: #{winning_rate_reversed.1} parent=0 // pred_check
    _
  $region27: #{winning_rate_reversed.1} parent=0 // pred_check_branch
    %59 = sbr.rel (0) target = $region29
  $region28: #{winning_rate_reversed.1} parent=0 // pred_region
    _
  $region29: #{winning_rate_reversed.1} parent=0 // pred_fallthru
    _

</llo_original>
